<compile_context>
chip_gen: v6e
topology: v6e:2x2x1
jax: 0.10.0
libtpu: 0.0.40
codegen_flags: <defaults>
</compile_context>

<pallas_src>
import jax
import jax.numpy as jnp
from jax import lax
from jax.experimental import pallas as pl
from jax.experimental.pallas import tpu as pltpu

P_APPLY = 0.5                  # probability p of the RandomApply module
_VMEM_BUDGET = 24 << 20        # total pipelined-VMEM target (all buffers)
_VMEM_LIMIT = 32 << 20         # explicit scoped-VMEM limit (safe on v5e/v6e/v7x)
_MIN_PALLAS_BYTES = 1 << 20    # below this, plain fused XLA is already optimal


def _affine_kernel(x_ref, p_ref, o_ref):
    # x_ref: (tm, HW); p_ref: (tm, 2) with gamma in col 0, beta in col 1.
    # (tm, 1) -> (tm, HW) is a cheap lane-broadcast of a sublane column.
    g = p_ref[:, 0:1]
    b = p_ref[:, 1:2]
    o_ref[...] = (x_ref[...].astype(jnp.float32) * g + b).astype(o_ref.dtype)


def _choose_tile_rows(rows, cols, itemsize, budget=_VMEM_BUDGET):
    """Row-tile size derived from a TOTAL pipelined-VMEM budget.

    Counts 2x input + 2x output x-tiles plus the double-buffered (tm, 2) f32
    param block (which pads to 128 lanes in VMEM).
    """
    sub = max(8, 32 // max(itemsize, 1))       # 8 f32, 16 bf16, 32 int8/fp8
    if rows <= sub:
        return rows                            # single full-extent block
    per_row = 4 * cols * itemsize + 2 * 128 * 4
    tm = max(sub, (budget // per_row) // sub * sub)
    if tm >= rows:
        # Whole array fits in one tile: split in ~half (rounded up to the
        # sublane multiple) so ("parallel",) can use both v7x TensorCores.
        half = -(-((rows + 1) // 2) // sub) * sub
        tm = min(half, rows)
    return int(tm)


def _apply_fn_pallas(x, gamma, beta):
    """fn(x) = gamma[c] * x + beta[c] via a tiled, auto-pipelined kernel."""
    N, C, H, W = x.shape
    rows, cols = N * C, H * W
    # Lane dim = H*W (256 here -> multiple of 128 -> unmasked lane stores).
    # Other spatial sizes still lower correctly (full-extent last dim), just
    # with masked partial stores when H*W % 128 != 0.
    x2 = x.reshape(rows, cols)

    # One packed per-row param array: column 0 = gamma, column 1 = beta.
    g_row = jnp.broadcast_to(gamma[None, :], (N, C)).reshape(rows)
    b_row = jnp.broadcast_to(beta[None, :], (N, C)).reshape(rows)
    params = jnp.stack([g_row, b_row], axis=-1).astype(jnp.float32)  # (rows, 2)

    tm = _choose_tile_rows(rows, cols, x2.dtype.itemsize)
    grid = (pl.cdiv(rows, tm),)        # ragged last block handled by Pallas

    out2 = pl.pallas_call(
        _affine_kernel,
        out_shape=jax.ShapeDtypeStruct((rows, cols), x2.dtype),
        grid=grid,
        in_specs=[
            pl.BlockSpec((tm, cols), lambda i: (i, 0)),
            pl.BlockSpec((tm, 2), lambda i: (i, 0)),
        ],
        out_specs=pl.BlockSpec((tm, cols), lambda i: (i, 0)),
        # NOTE: no input_output_aliases — without donating x at the jit
        # boundary XLA would insert a defensive copy, negating the benefit.
        compiler_params=pltpu.CompilerParams(
            dimension_semantics=("parallel",),
            vmem_limit_bytes=_VMEM_LIMIT,
        ),
    )(x2, params)
    return out2.reshape(N, C, H, W)


def apply_fn(x, gamma, beta, *, min_pallas_bytes=_MIN_PALLAS_BYTES):
    """The wrapped fn: per-channel affine.  Tiny inputs skip Pallas."""
    if x.size * x.dtype.itemsize < min_pallas_bytes:
        C = x.shape[1]
        g = gamma.reshape(1, C, 1, 1).astype(jnp.float32)
        b = beta.reshape(1, C, 1, 1).astype(jnp.float32)
        return (x.astype(jnp.float32) * g + b).astype(x.dtype)
    return _apply_fn_pallas(x, gamma, beta)


def random_apply(x, gamma, beta, key, p=P_APPLY):
    """RandomApply.forward: identity if u > p else fn(x)."""
    u = jax.random.uniform(key, (), dtype=jnp.float32)
    return lax.cond(
        u <= jnp.float32(p),
        lambda xx: apply_fn(xx, gamma, beta),
        lambda xx: xx,
        x,
    )


if __name__ == "__main__":
    root = jax.random.PRNGKey(0)
    k_x, k_draw = jax.random.split(root)

    N, C, H, W = 2, 4, 16, 16
    x = jax.random.normal(k_x, (N, C, H, W), dtype=jnp.float32)

    # Deterministic parameters of the wrapped fn (per-channel affine).
    gamma = 1.0 + 0.1 * jnp.arange(C, dtype=jnp.float32)
    beta = 0.01 * jnp.arange(C, dtype=jnp.float32)

    fx_ref = x * gamma.reshape(1, C, 1, 1) + beta.reshape(1, C, 1, 1)

    # 1) Exercise the Pallas kernel directly (bypassing the small-input
    #    fast path) and check it against the reference.
    fx_kernel = jax.block_until_ready(_apply_fn_pallas(x, gamma, beta))
    assert fx_kernel.shape == x.shape and fx_kernel.dtype == x.dtype
    assert jnp.allclose(fx_kernel, fx_ref, atol=1e-6, rtol=1e-6), (
        "fn(x) kernel mismatch vs reference"
    )

    # 2) Full RandomApply forward: output must equal exactly one of the two
    #    branches (identity or fn(x)).
    out = jax.block_until_ready(random_apply(x, gamma, beta, k_draw, p=P_APPLY))
    assert out.shape == x.shape and out.dtype == x.dtype
    is_identity = bool(jnp.allclose(out, x, atol=1e-6))
    is_fn = bool(jnp.allclose(out, fx_ref, atol=1e-6))
    assert is_identity or is_fn, "output matches neither branch of RandomApply"

    print("KERNEL_OK")
</pallas_src>

<mosaic_0001>
module attributes {stable_mosaic.version = 11 : i64} {
  func.func @_affine_kernel(%arg0: i32, %arg1: memref<8x256xf32, #tpu.memory_space<vmem>>, %arg2: memref<8x2xf32, #tpu.memory_space<vmem>>, %arg3: memref<8x256xf32, #tpu.memory_space<vmem>>) attributes {dimension_semantics = [#tpu.dimension_semantics<parallel>], iteration_bounds = array<i64: 1>, scalar_prefetch = 0 : i64, scratch_operands = 0 : i64, tpu.core_type = #tpu.core_type<tc>, window_params = [{transform_indices = @transform_0, window_bounds = array<i64: 8, 256>}, {transform_indices = @transform_1, window_bounds = array<i64: 8, 2>}, {transform_indices = @transform_2, window_bounds = array<i64: 8, 256>}]} {
    %c0 = arith.constant 0 : index
    %c0_0 = arith.constant 0 : index
    %0 = vector.load %arg2[%c0, %c0_0] : memref<8x2xf32, #tpu.memory_space<vmem>>, vector<8x1xf32>
    %c0_1 = arith.constant 0 : index
    %c1 = arith.constant 1 : index
    %1 = vector.load %arg2[%c0_1, %c1] : memref<8x2xf32, #tpu.memory_space<vmem>>, vector<8x1xf32>
    %c0_2 = arith.constant 0 : index
    %c0_3 = arith.constant 0 : index
    %2 = vector.load %arg1[%c0_2, %c0_3] : memref<8x256xf32, #tpu.memory_space<vmem>>, vector<8x256xf32>
    %3 = vector.broadcast %0 : vector<8x1xf32> to vector<8x256xf32>
    %4 = arith.mulf %2, %3 : vector<8x256xf32>
    %5 = vector.broadcast %1 : vector<8x1xf32> to vector<8x256xf32>
    %6 = arith.addf %4, %5 : vector<8x256xf32>
    %c0_4 = arith.constant 0 : index
    %c0_5 = arith.constant 0 : index
    %7 = vector.load %arg3[%c0_4, %c0_5] : memref<8x256xf32, #tpu.memory_space<vmem>>, vector<8x256xf32>
    tpu.vector_store %arg3[%c0_4, %c0_5], %6 {strides = array<i32>} : memref<8x256xf32, #tpu.memory_space<vmem>>, vector<8x256xf32>,
    return
  }
  func.func @transform_0(%arg0: i32) -> (i32, i32) {
    %c0_i32 = arith.constant 0 : i32
    %c0_i32_0 = arith.constant 0 : i32
    return %arg0, %c0_i32 : i32, i32
  }
  func.func @transform_1(%arg0: i32) -> (i32, i32) {
    %c0_i32 = arith.constant 0 : i32
    %c0_i32_0 = arith.constant 0 : i32
    return %arg0, %c0_i32 : i32, i32
  }
  func.func @transform_2(%arg0: i32) -> (i32, i32) {
    %c0_i32 = arith.constant 0 : i32
    %c0_i32_0 = arith.constant 0 : i32
    return %arg0, %c0_i32 : i32, i32
  }
}

</mosaic_0001>

<llo_original>
// kernel: tpu_custom_call.1
$region0: #{tpu_custom_call.1}
  #allocation0 [shape = 'u32[]', space=smem, size = 0x4, offset = 0x4, fixed_abs, tag = 'smem constant byte address 0x4 - core index']
  #allocation1 [shape = 'u32[144,128]{1,0:T(1,128)}', space=vmem, size = 0x12000, scoped, tag = 'internal scratch']
  %s0 = inlined_call_operand.hbm [shape: f32[8,256], index: 0, kind: input, shape index: {}]
  %s1 = inlined_call_operand.vmem [shape: f32[8,2], index: 1, kind: input, shape index: {}]
  %s2 = inlined_call_operand.hbm [shape: f32[8,256], index: 2, kind: output, shape index: {}]
  %s3 = sld [smem:[#allocation0]]
  $region22: #{tpu_custom_call.1} parent=0
    _
  %s5 = ssub.s32 1, %s3
  %s6 = scalar_select 0, %s5, %s3
  $region1: #{tpu_custom_call.1} parent=0
    #allocation2 [shape = 'u8[8192]{0}', space=vmem, size = 0x2000, scoped, tag = 'input window, operand 0, single buffered']
    #allocation3 [shape = 's32[1]{0}', space=sflag, size = 0x4, scoped, tag = 'scoped memory for tpu_custom_call.1']
    #allocation4 [shape = 's32[1]{0}', space=sflag, size = 0x4, scoped, tag = 'scoped memory for tpu_custom_call.1']
    #allocation5 [shape = 'u8[8192]{0}', space=vmem, size = 0x2000, scoped, tag = 'output window, operand 0, single buffered']
    %7 = vsyncpa [#allocation3], 0
    %8 = vsyncpa [#allocation4], 0
    // Predicated region
    $region2: #{tpu_custom_call.1} parent=1 // pred_check
      _
    $region3: #{tpu_custom_call.1} parent=1 // pred_check_branch
      %10 = sbr.rel (0) target = $region5
    $region4: #{tpu_custom_call.1} parent=1 // pred_region
      %s12 = ssub.s32 256, 256
      %13 = vsyncadd [#allocation3], %s12
      %s15 = sshll.u32 [#allocation2], 4
      %s16 = int_to_ptr.vmem [resolvable:$true] %s15
      %18 = dma.hbm_to_vmem [thread:$0]  %s0, 256, %s16, [#allocation3]
    $region5: #{tpu_custom_call.1} parent=1 // pred_fallthru
      _
    // Predicated region
    $region6: #{tpu_custom_call.1} parent=1 // pred_check
      _
    $region7: #{tpu_custom_call.1} parent=1 // pred_check_branch
      %20 = sbr.rel (0) target = $region9
    $region8: #{tpu_custom_call.1} parent=1 // pred_region
      _
    $region9: #{tpu_custom_call.1} parent=1 // pred_fallthru
      _
    // Predicated region
    $region10: #{tpu_custom_call.1} parent=1 // pred_check
      _
    $region11: #{tpu_custom_call.1} parent=1 // pred_check_branch
      %22 = sbr.rel (0) target = $region13
    $region12: #{tpu_custom_call.1} parent=1 // pred_region
      %23 = dma.done [#allocation3], 256
    $region13: #{tpu_custom_call.1} parent=1 // pred_fallthru
      _
    %v24 = vld [vmem:[%s1] sm:$0xff]
    %v25 = vld [vmem:[#allocation2] sm:$0xff]
    %v26 = vld [vmem:[#allocation2 + $0x8] sm:$0xff]
    %28 = vset.pattern.permute.xlu0 0
    %29 = vperm.xlu0 %28, %v24
    %v30 = vpop.permute.xlu0 %29
    %v32 = vmul.f32 %v25, %v30
    %v33 = vmul.f32 %v26, %v30
    %34 = vset.pattern.permute.xlu0 1
    %35 = vperm.xlu0 %34, %v24
    %v36 = vpop.permute.xlu0 %35
    %v38 = vadd.f32 %v32, %v36
    %v39 = vadd.f32 %v33, %v36
    %40 = vst [vmem:[#allocation5] sm:$0xff] %v38
    %41 = vst [vmem:[#allocation5 + $0x8] sm:$0xff] %v39
    // Predicated region
    $region14: #{tpu_custom_call.1} parent=1 // pred_check
      _
    $region15: #{tpu_custom_call.1} parent=1 // pred_check_branch
      %43 = sbr.rel (0) target = $region17
    $region16: #{tpu_custom_call.1} parent=1 // pred_region
      %s45 = ssub.s32 256, 256
      %46 = vsyncadd [#allocation4], %s45
      %s48 = sshll.u32 [#allocation5], 4
      %s49 = int_to_ptr.vmem [resolvable:$true] %s48
      %51 = dma.vmem_to_hbm [thread:$0]  %s49, 256, %s2, [#allocation4]
    $region17: #{tpu_custom_call.1} parent=1 // pred_fallthru
      _
    // Predicated region
    $region18: #{tpu_custom_call.1} parent=1 // pred_check
      _
    $region19: #{tpu_custom_call.1} parent=1 // pred_check_branch
      %53 = sbr.rel (0) target = $region21
    $region20: #{tpu_custom_call.1} parent=1 // pred_region
      %54 = dma.done [#allocation4], 256
    $region21: #{tpu_custom_call.1} parent=1 // pred_fallthru
      _
    %55 = vsyncpa [#allocation3], 1
    %56 = vsyncpa [#allocation4], 1

</llo_original>
